<compile_context>
chip_gen: v5e
topology: v5e:2x2
jax: 0.10.0
libtpu: 0.0.40
codegen_flags: <defaults>
</compile_context>

<pallas_src>
import functools
import math

import jax
import jax.numpy as jnp
from jax.experimental import pallas as pl
from jax.experimental.pallas import tpu as pltpu


def _round_up(x, m):
    return ((x + m - 1) // m) * m


# --------------------------------------------------------------------------- #
# Pallas kernel: one (batch, lane-tile) step of   o = act(W @ x)              #
# --------------------------------------------------------------------------- #
def _fused_conv_kernel(x_ref, w_ref, o_ref, *, activation):
    """x_ref: (GKp, TL) bf16 normalized im2col patches (+ ones row for bias).
    w_ref: (GOp, GKp) bf16 block-diagonal ZCA+conv weight (+ bias column).
    o_ref: (GOp, TL)  f32  lane-dense output tile (TL multiple of 128).
    """
    y = jnp.dot(w_ref[...], x_ref[...], preferred_element_type=jnp.float32)
    if activation == "relu":
        y = jnp.maximum(y, 0.0)
    elif activation == "sigmoid":
        y = jax.nn.sigmoid(y)
    elif activation == "tanh":
        y = jnp.tanh(y)
    # activation == "none": pass through
    o_ref[...] = y.astype(o_ref.dtype)


# --------------------------------------------------------------------------- #
# Host-side (plain JAX) operand preparation                                   #
# --------------------------------------------------------------------------- #
def _build_patches_and_weight(x, weight, zca_mean, zca_w, *, groups, stride,
                              padding, epsilon):
    """Normalized bf16 patches in (B, GKp, Lp) layout + fused bf16 weight.

    Per-row normalization statistics are computed from strided views of the
    padded input; no f32 im2col tensor is ever materialized in HBM.
    """
    B, C, H, W = x.shape
    OC, IPG, KH, KW = weight.shape
    assert C == IPG * groups and OC % groups == 0
    OPG = OC // groups
    sh, sw = stride

    if padding == "same":
        # module: padding = (kernel_height - 1) / 2 used for BOTH spatial dims
        p = (KH - 1) / 2
        p0, p1 = math.ceil(p), math.floor(p)
        xpad = jnp.pad(x, ((0, 0), (0, 0), (p0, p1), (p0, p1))).astype(jnp.float32)
    else:
        # TODO(synk): the module's 'valid' branch does `int // tuple` (broken);
        # only the 'same' path is reproducible.
        raise ValueError("only padding='same' is supported")

    Hp, Wp = xpad.shape[2], xpad.shape[3]
    out_h = (Hp - KH) // sh + 1
    out_w = (Wp - KW) // sw + 1
    L = out_h * out_w
    K = IPG * KH * KW
    GK, GO = groups * K, OC
    n = B * L

    def _view(kh, kw):                                   # (B, C, oh, ow) view
        return xpad[:, :, kh:kh + sh * out_h:sh, kw:kw + sw * out_w:sw]

    # --- per-(c, kh, kw) stats straight from xpad views (lightweight, f32) ---
    s1, s2 = [], []
    for kh in range(KH):
        for kw in range(KW):
            v = _view(kh, kw)
            s1.append(jnp.sum(v, axis=(0, 2, 3)))
            s2.append(jnp.sum(v * v, axis=(0, 2, 3)))
    mean = jnp.stack(s1, axis=1) / n                                 # (C, KH*KW)
    var = jnp.maximum(jnp.stack(s2, axis=1) / n - mean * mean, 0.0)  # ddof=0
    invstd = 1.0 / jnp.sqrt(var + epsilon)

    # --- normalized bf16 patches, built once, directly in (B, GK, L) layout ---
    cols = []
    kk = 0
    for kh in range(KH):
        for kw in range(KW):
            v = _view(kh, kw)
            nrm = (v - mean[None, :, kk, None, None]) * invstd[None, :, kk, None, None]
            cols.append(nrm.astype(jnp.bfloat16).reshape(B, C, 1, L))
            kk += 1
    pat = jnp.concatenate(cols, axis=2).reshape(B, GK, L)  # row = c*KH*KW + kh*KW + kw

    # fold the bias into the matmul: ones row on x <-> bias column on W
    pat = jnp.concatenate([pat, jnp.ones((B, 1, L), jnp.bfloat16)], axis=1)

    # pad: GK+1 -> mult of 16 (bf16 sublanes), L -> mult of 128 (lane-dense),
    # GO -> mult of 8 (f32 sublanes).  Padded rows/cols are zero -> no-ops.
    GKp = _round_up(GK + 1, 16)
    Lp = _round_up(L, 128)
    GOp = _round_up(GO, 8)
    pat = jnp.pad(pat, ((0, 0), (0, GKp - (GK + 1)), (0, Lp - L)))

    # --- fuse ZCA-whitening + grouped conv into one block-diagonal weight ---
    wT = weight.reshape(groups, OPG, K).transpose(0, 2, 1).astype(jnp.float32)
    zca = zca_w.astype(jnp.float32)                              # (G, K, K)
    zmean = zca_mean.reshape(groups, K).astype(jnp.float32)      # (G, K)
    A = jnp.einsum("gkj,gjo->gko", zca, wT)                      # (G, K, OPG)
    b_g = -jnp.einsum("gk,gko->go", zmean, A)                    # (G, OPG)

    # Block-diagonal (GO, GK): all groups in a single MXU call per lane tile.
    # NOTE: block-diagonal packing is G x redundant in weight bytes vs the sum
    # of per-group (OPG, K) blocks; total is still only OC*C*KH*KW bf16 values.
    # For very large GO*GK switch to a grid axis over groups instead.
    w_bd = jnp.einsum("gh,gok->gohk", jnp.eye(groups, dtype=jnp.float32),
                      A.transpose(0, 2, 1)).reshape(GO, GK)
    w_full = jnp.concatenate([w_bd, b_g.reshape(GO, 1)], axis=1)  # bias column
    w_full = jnp.pad(w_full, ((0, GOp - GO), (0, GKp - (GK + 1))))

    meta = dict(B=B, OC=OC, GO=GO, GOp=GOp, GKp=GKp, L=L, Lp=Lp,
                out_h=out_h, out_w=out_w)
    return pat, w_full.astype(jnp.bfloat16), meta


def _vmem_capacity_bytes():
    """Physical VMEM per TensorCore; conservative (v7x, 64 MiB) fallback."""
    try:
        info = pltpu.get_tpu_info()
        for name in ("vmem_capacity_bytes", "vmem_size_bytes", "vmem_bytes"):
            cap = getattr(info, name, None)
            if cap:
                return int(cap)
    except Exception:
        pass
    return 64 * 1024 * 1024


def _pick_tl(Lp, B, GKp, GOp, vmem_cap):
    """Lane-tile size: largest multiple of 128 such that the double-buffered
    x/out tiles plus the resident weight fit a conservative VMEM budget."""
    budget = min(int(vmem_cap * 0.7), 100 * 1024 * 1024)
    fixed = 2 * GOp * GKp * 2                      # weight (worst case 2 bufs)
    per_lane = 2 * GKp * 2 + 2 * GOp * 4           # dbl-buf bf16 x + f32 out
    avail = max(budget - fixed, 128 * per_lane)
    tl = min(Lp, 8192, max(128, (avail // per_lane) // 128 * 128))
    while Lp % tl:
        tl -= 128
    # Prefer >=4 total grid steps (v7x: 2 TensorCores x double buffering) as
    # long as tiles stay large (>=512 lanes) so 1-TC parts lose nothing.
    while B * (Lp // tl) < 4 and tl >= 1024 and (tl // 2) % 128 == 0 \
            and Lp % (tl // 2) == 0:
        tl //= 2
    return tl


# --------------------------------------------------------------------------- #
# Forward                                                                     #
# --------------------------------------------------------------------------- #
def conv2d_parallel_forward(x, weight, zca_mean, zca_w, *, groups,
                            stride=(1, 1), padding="same",
                            epsilon=0.00015, pooling=False,
                            activation="relu"):
    """Eval-stage forward of Conv2d_Parallel.  x: (B, C, H, W) float32."""
    pat, w_bf, meta = _build_patches_and_weight(
        x, weight, zca_mean, zca_w, groups=groups, stride=stride,
        padding=padding, epsilon=epsilon)
    B, GOp, GKp, Lp = meta["B"], meta["GOp"], meta["GKp"], meta["Lp"]
    vmem_cap = _vmem_capacity_bytes()
    TL = _pick_tl(Lp, B, GKp, GOp, vmem_cap)
    need = 2 * GOp * GKp * 2 + 2 * GKp * TL * 2 + 2 * GOp * TL * 4 + (1 << 20)
    vmem_limit = int(min(vmem_cap * 0.9, max(2 * need, 32 * 1024 * 1024)))

    def _run(single_buffer_weight):
        if single_buffer_weight:
            w_spec = pl.BlockSpec((GOp, GKp), lambda b, l: (0, 0),
                                  pipeline_mode=pl.Buffered(1))
        else:
            w_spec = pl.BlockSpec((GOp, GKp), lambda b, l: (0, 0))
        return pl.pallas_call(
            functools.partial(_fused_conv_kernel, activation=activation),
            out_shape=jax.ShapeDtypeStruct((B, GOp, Lp), jnp.float32),
            grid_spec=pltpu.PrefetchScalarGridSpec(
                num_scalar_prefetch=0,
                grid=(B, Lp // TL),
                in_specs=[
                    # `None` squeezes the batch dim out of the kernel view.
                    pl.BlockSpec((None, GKp, TL), lambda b, l: (b, 0, l)),
                    w_spec,                                  # resident weight
                ],
                out_specs=pl.BlockSpec((None, GOp, TL), lambda b, l: (b, 0, l)),
            ),
            compiler_params=pltpu.CompilerParams(
                dimension_semantics=("parallel", "parallel"),
                vmem_limit_bytes=vmem_limit),
        )(pat, w_bf)

    try:
        out = _run(True)          # single-buffered resident weight
    except Exception:
        out = _run(False)         # jax without pipeline_mode / Buffered(1)

    # Output is already in folded (B, OC, L) layout: drop padding, free reshape.
    out = out[:, :meta["GO"], :meta["L"]].reshape(
        meta["B"], meta["OC"], meta["out_h"], meta["out_w"])

    if pooling:
        # module's only implemented mode: F.avg_pool2d(kernel_size=2, stride=2)
        Bo, Co, oh, ow = out.shape
        out = out[:, :, :oh // 2 * 2, :ow // 2 * 2]
        out = out.reshape(Bo, Co, oh // 2, 2, ow // 2, 2).mean(axis=(3, 5))
    return out


# --------------------------------------------------------------------------- #
# Pure-JAX f32 reference of the original chain (for verification only)        #
# --------------------------------------------------------------------------- #
def _reference_exact(x, weight, zca_mean, zca_w, *, groups, stride=(1, 1),
                     epsilon=0.00015):
    B, C, H, W = x.shape
    OC, IPG, KH, KW = weight.shape
    OPG = OC // groups
    sh, sw = stride
    p = (KH - 1) / 2
    xpad = jnp.pad(x, ((0, 0), (0, 0), (math.ceil(p), math.floor(p)),
                       (math.ceil(p), math.floor(p)))).astype(jnp.float32)
    Hp, Wp = xpad.shape[2], xpad.shape[3]
    out_h = (Hp - KH) // sh + 1
    out_w = (Wp - KW) // sw + 1
    L = out_h * out_w
    K = IPG * KH * KW
    cols = []
    for kh in range(KH):
        for kw in range(KW):
            cols.append(xpad[:, :, kh:kh + sh * out_h:sh, kw:kw + sw * out_w:sw])
    pat = jnp.stack(cols, axis=2).reshape(B, groups, K, L)
    pat = pat.transpose(1, 0, 3, 2).reshape(groups, B * L, K)
    mean = jnp.mean(pat, axis=1, keepdims=True)
    var = jnp.var(pat, axis=1, keepdims=True)
    pat = (pat - mean) / jnp.sqrt(var + epsilon)
    pat = jnp.einsum("gmk,gkn->gmn", pat - zca_mean, zca_w)
    wT = weight.reshape(groups, OPG, K).transpose(0, 2, 1).astype(jnp.float32)
    y = jnp.maximum(jnp.einsum("gmk,gko->gmo", pat, wT), 0.0)
    return y.reshape(groups, B, L, OPG).transpose(1, 0, 3, 2).reshape(
        B, OC, out_h, out_w)


if __name__ == "__main__":
    # Module config: Conv2d_Parallel(in_channels=4, out_channels=8, kernel_size=3,
    #                                stride=1, padding='same', groups=2, bias=False,
    #                                activation='relu', pooling=False), eval mode.
    B, C_IN, H, W = 2, 4, 16, 16
    C_OUT, KH, KW, GROUPS = 8, 3, 3, 2
    IPG = C_IN // GROUPS
    K = IPG * KH * KW

    key = jax.random.PRNGKey(0)
    kx, kw_ = jax.random.split(key)
    x = jax.random.normal(kx, (B, C_IN, H, W), dtype=jnp.float32)
    # reset_parameters(): init.normal_(weight) -> standard normal, no bias.
    weight = jax.random.normal(kw_, (C_OUT, IPG, KH, KW), dtype=jnp.float32)
    # Deterministic (unfitted) ZCA state: zero mean, identity whitening per group.
    zca_mean = jnp.zeros((GROUPS, 1, K), dtype=jnp.float32)
    zca_w = jnp.broadcast_to(jnp.eye(K, dtype=jnp.float32), (GROUPS, K, K)).copy()

    out = conv2d_parallel_forward(x, weight, zca_mean, zca_w, groups=GROUPS,
                                  stride=(1, 1), padding="same")
    out = jax.block_until_ready(out)
    assert out.shape == (B, C_OUT, H, W)

    # Tight check: kernel vs an identical-precision (bf16 operands, f32 accum)
    # plain-JAX evaluation of the exact fused operands the kernel consumes.
    pat, w_bf, meta = _build_patches_and_weight(
        x, weight, zca_mean, zca_w, groups=GROUPS, stride=(1, 1),
        padding="same", epsilon=0.00015)
    ref_bf = jnp.maximum(
        jnp.einsum("ok,bkl->bol", w_bf, pat,
                   preferred_element_type=jnp.float32), 0.0)
    ref_bf = ref_bf[:, :meta["GO"], :meta["L"]].reshape(
        B, C_OUT, meta["out_h"], meta["out_w"])
    assert jnp.allclose(out, ref_bf, atol=2e-3, rtol=2e-3), \
        "mismatch vs matched-precision reference"

    # Sanity check vs the full-f32 original chain; patches are normalized in
    # f32 BEFORE the bf16 cast, so only O(1)-scale bf16 rounding remains.
    ref = _reference_exact(x, weight, zca_mean, zca_w, groups=GROUPS)
    assert jnp.allclose(out, ref, atol=0.15, rtol=0.05), "mismatch vs f32 reference"

    print("KERNEL_OK")
</pallas_src>

<mosaic_0001>
module attributes {stable_mosaic.version = 11 : i64} {
  func.func @_fused_conv_kernel(%arg0: i32, %arg1: i32, %arg2: memref<1x48x256xbf16, #tpu.memory_space<vmem>>, %arg3: memref<8x48xbf16, #tpu.memory_space<vmem>>, %arg4: memref<1x8x256xf32, #tpu.memory_space<vmem>>) attributes {dimension_semantics = [#tpu.dimension_semantics<parallel>, #tpu.dimension_semantics<parallel>], iteration_bounds = array<i64: 2, 1>, scalar_prefetch = 0 : i64, scratch_operands = 0 : i64, tpu.core_type = #tpu.core_type<tc>, window_params = [{transform_indices = @transform_0, window_bounds = array<i64: 1, 48, 256>}, {pipeline_mode = #tpu.pipeline_mode<synchronous>, transform_indices = @transform_1, window_bounds = array<i64: 8, 48>}, {transform_indices = @transform_2, window_bounds = array<i64: 1, 8, 256>}]} {
    %c0 = arith.constant 0 : index
    %c0_0 = arith.constant 0 : index
    %0 = vector.load %arg3[%c0, %c0_0] : memref<8x48xbf16, #tpu.memory_space<vmem>>, vector<8x48xbf16>
    %c0_1 = arith.constant 0 : index
    %c0_2 = arith.constant 0 : index
    %c0_3 = arith.constant 0 : index
    %1 = vector.load %arg2[%c0_1, %c0_2, %c0_3] : memref<1x48x256xbf16, #tpu.memory_space<vmem>>, vector<1x48x256xbf16>
    %2 = vector.shape_cast %1 : vector<1x48x256xbf16> to vector<48x256xbf16>
    %cst = arith.constant dense<0.000000e+00> : vector<8x256xf32>
    %3 = tpu.matmul %0, %2, %cst {dimension_numbers = #tpu.dot_dimension_numbers<[1], [0], [0], [1], [0, 0, 1, 1], [], []>} : vector<8x48xbf16>, vector<48x256xbf16>, vector<8x256xf32> -> vector<8x256xf32>
    %cst_4 = arith.constant 0.000000e+00 : f32
    %4 = vector.broadcast %cst_4 : f32 to vector<8x256xf32>
    %5 = arith.maximumf %3, %4 : vector<8x256xf32>
    %c0_5 = arith.constant 0 : index
    %c0_6 = arith.constant 0 : index
    %c0_7 = arith.constant 0 : index
    %6 = vector.load %arg4[%c0_5, %c0_6, %c0_7] : memref<1x8x256xf32, #tpu.memory_space<vmem>>, vector<1x8x256xf32>
    %7 = vector.shape_cast %6 : vector<1x8x256xf32> to vector<8x256xf32>
    %8 = vector.shape_cast %5 : vector<8x256xf32> to vector<1x8x256xf32>
    tpu.vector_store %arg4[%c0_5, %c0_6, %c0_7], %8 {strides = array<i32>} : memref<1x8x256xf32, #tpu.memory_space<vmem>>, vector<1x8x256xf32>,
    return
  }
  func.func @transform_0(%arg0: i32, %arg1: i32) -> (i32, i32, i32) {
    %c0_i32 = arith.constant 0 : i32
    %c0_i32_0 = arith.constant 0 : i32
    return %arg0, %c0_i32, %arg1 : i32, i32, i32
  }
  func.func @transform_1(%arg0: i32, %arg1: i32) -> (i32, i32) {
    %c0_i32 = arith.constant 0 : i32
    %c0_i32_0 = arith.constant 0 : i32
    %c0_i32_1 = arith.constant 0 : i32
    return %c0_i32, %c0_i32_0 : i32, i32
  }
  func.func @transform_2(%arg0: i32, %arg1: i32) -> (i32, i32, i32) {
    %c0_i32 = arith.constant 0 : i32
    %c0_i32_0 = arith.constant 0 : i32
    return %arg0, %c0_i32, %arg1 : i32, i32, i32
  }
}

module attributes {stable_mosaic.version = 11 : i64} {
  func.func @_fused_conv_kernel(%arg0: i32, %arg1: i32, %arg2: memref<1x48x256xbf16, #tpu.memory_space<vmem>>, %arg3: memref<8x48xbf16, #tpu.memory_space<vmem>>, %arg4: memref<1x8x256xf32, #tpu.memory_space<vmem>>) attributes {dimension_semantics = [#tpu.dimension_semantics<parallel>, #tpu.dimension_semantics<parallel>], iteration_bounds = array<i64: 2, 1>, scalar_prefetch = 0 : i64, scratch_operands = 0 : i64, tpu.core_type = #tpu.core_type<tc>, window_params = [{transform_indices = @transform_0, window_bounds = array<i64: 1, 48, 256>}, {pipeline_mode = #tpu.pipeline_mode<synchronous>, transform_indices = @transform_1, window_bounds = array<i64: 8, 48>}, {transform_indices = @transform_2, window_bounds = array<i64: 1, 8, 256>}]} {
    %c0 = arith.constant 0 : index
    %c0_0 = arith.constant 0 : index
    %0 = vector.load %arg3[%c0, %c0_0] : memref<8x48xbf16, #tpu.memory_space<vmem>>, vector<8x48xbf16>
    %c0_1 = arith.constant 0 : index
    %c0_2 = arith.constant 0 : index
    %c0_3 = arith.constant 0 : index
    %1 = vector.load %arg2[%c0_1, %c0_2, %c0_3] : memref<1x48x256xbf16, #tpu.memory_space<vmem>>, vector<1x48x256xbf16>
    %2 = vector.shape_cast %1 : vector<1x48x256xbf16> to vector<48x256xbf16>
    %cst = arith.constant dense<0.000000e+00> : vector<8x256xf32>
    %3 = tpu.matmul %0, %2, %cst {dimension_numbers = #tpu.dot_dimension_numbers<[1], [0], [0], [1], [0, 0, 1, 1], [], []>} : vector<8x48xbf16>, vector<48x256xbf16>, vector<8x256xf32> -> vector<8x256xf32>
    %cst_4 = arith.constant 0.000000e+00 : f32
    %4 = vector.broadcast %cst_4 : f32 to vector<8x256xf32>
    %5 = arith.maximumf %3, %4 : vector<8x256xf32>
    %c0_5 = arith.constant 0 : index
    %c0_6 = arith.constant 0 : index
    %c0_7 = arith.constant 0 : index
    %6 = vector.load %arg4[%c0_5, %c0_6, %c0_7] : memref<1x8x256xf32, #tpu.memory_space<vmem>>, vector<1x8x256xf32>
    %7 = vector.shape_cast %6 : vector<1x8x256xf32> to vector<8x256xf32>
    %8 = vector.shape_cast %5 : vector<8x256xf32> to vector<1x8x256xf32>
    tpu.vector_store %arg4[%c0_5, %c0_6, %c0_7], %8 {strides = array<i32>} : memref<1x8x256xf32, #tpu.memory_space<vmem>>, vector<1x8x256xf32>,
    return
  }
  func.func @transform_0(%arg0: i32, %arg1: i32) -> (i32, i32, i32) {
    %c0_i32 = arith.constant 0 : i32
    %c0_i32_0 = arith.constant 0 : i32
    return %arg0, %c0_i32, %arg1 : i32, i32, i32
  }
  func.func @transform_1(%arg0: i32, %arg1: i32) -> (i32, i32) {
    %c0_i32 = arith.constant 0 : i32
    %c0_i32_0 = arith.constant 0 : i32
    %c0_i32_1 = arith.constant 0 : i32
    return %c0_i32, %c0_i32_0 : i32, i32
  }
  func.func @transform_2(%arg0: i32, %arg1: i32) -> (i32, i32, i32) {
    %c0_i32 = arith.constant 0 : i32
    %c0_i32_0 = arith.constant 0 : i32
    return %arg0, %c0_i32, %arg1 : i32, i32, i32
  }
}

</mosaic_0001>

<llo_original>
// kernel: tpu_custom_call.1
$region0: #{tpu_custom_call.1}
  #allocation0 [shape = 'u32[]', space=smem, size = 0x4, offset = 0x4, fixed_abs, tag = 'smem constant byte address 0x4 - core index']
  #allocation1 [shape = 'u32[72,128]{1,0:T(1,128)}', space=vmem, size = 0x9000, scoped, tag = 'internal scratch']
  %s0 = inlined_call_operand.hbm [shape: bf16[2,48,256], index: 0, kind: input, shape index: {}]
  %s1 = inlined_call_operand.hbm [shape: bf16[8,48], index: 1, kind: input, shape index: {}]
  %s2 = inlined_call_operand.hbm [shape: f32[2,8,256], index: 2, kind: output, shape index: {}]
  %s3 = sld [smem:[#allocation0]]
  $region49: #{tpu_custom_call.1} parent=0
    _
  %s5 = ssub.s32 1, %s3
  %s6 = scalar_select 0, %s5, %s3
  $region1: #{tpu_custom_call.1} parent=0
    #allocation2 [shape = 'u8[49152]{0}', space=vmem, size = 0xc000, scoped, tag = 'input window, operand 0']
    #allocation3 [shape = 's32[2]{0}', space=sflag, size = 0x8, scoped, tag = 'scoped memory for tpu_custom_call.1']
    #allocation4 [shape = 's32[2]{0}', space=sflag, size = 0x8, scoped, tag = 'scoped memory for tpu_custom_call.1']
    #allocation5 [shape = 'u8[2048]{0}', space=vmem, size = 0x800, scoped, tag = 'input window, operand 1, single buffered']
    #allocation6 [shape = 's32[1]{0}', space=sflag, size = 0x4, scoped, tag = 'scoped memory for tpu_custom_call.1']
    #allocation7 [shape = 'u8[16384]{0}', space=vmem, size = 0x4000, scoped, tag = 'output window, operand 0']
    %7 = vsyncpa [#allocation3], 0
    %s8 = scalar_lea.sflag [#allocation3], 1
    %9 = vsyncpa %s8, 0
    %10 = vsyncpa [#allocation6], 0
    %11 = vsyncpa [#allocation4], 0
    %s12 = scalar_lea.sflag [#allocation4], 1
    %13 = vsyncpa %s12, 0
    loop: start=0, step=1, limit=4
    $region2: #{tpu_custom_call.1} parent=1 // loop_pre_header
      _
    $region3: #{tpu_custom_call.1} parent=1 // loop_header
      %s15 = sphi 0, %s19
      %p16 = scmp.ge.s32.totalorder %s15, 4
      %s22 = sphi 0, %s34
      %s23 = sphi 0, %s30
      %s24 = sphi 0, %s22
      %s25 = sphi 0, %s23
      %s26 = sphi 0, %s24
      %s27 = sphi 0, %s25
      %s39 = sphi 0, %s41
      %s42 = sphi 0, %s39
      %s43 = sphi 0, %s42
      %s59 = sphi 0, %s43
      %s63 = sphi 0, %s63
      %s65 = sphi 0, %s63
      %s66 = sphi 0, %s65
      %s80 = sphi 0, %s66
      %s88 = sphi 0, %s90
      %s91 = sphi 0, %s88
      %s92 = sphi 0, %s91
      %s108 = sphi 0, %s92
    $region4: #{tpu_custom_call.1} parent=1 // loop_header_branch
      %18 = sbr.rel (%p16) target = $region8
    $region5: #{tpu_custom_call.1} parent=1 // loop_body
      %s20 = ssub.s32 %s15, 1
      %s21 = ssub.s32 %s15, 2
      %s28 = sadd.s32 1, %s23
      %p29 = scmp.ge.s32.totalorder %s28, 1
      %s30 = scalar_select %p29, 0, %s28
      %s31 = sadd.s32 1, %s22
      %s32 = scalar_select %p29, %s31, %s22
      %p33 = scmp.ge.s32.totalorder %s32, 2
      %s34 = scalar_select %p33, 0, %s32
      %s35 = ssub.s32 %s22, %s34
      %s36 = ssub.s32 %s23, %s30
      %s37 = sor.u32 %s35, %s36
      %p38 = scmp.eq.s32.totalorder %s37, 0
      %s40 = sadd.s32 %s39, 1
      %s41 = scalar_select %p38, %s39, %s40
      %p44 = pneg %p38
      %p45 = scmp.eq.s32.totalorder %s15, 1
      %p46 = por %p44, %p45
      %p47 = scmp.ne.s32.totalorder %s39, %s42
      %p48 = scmp.eq.s32.totalorder %s15, 0
      %p49 = por %p47, %p48
      %p50 = scmp.ne.s32.totalorder %s39, %s42
      %p51 = scmp.eq.s32.totalorder %s20, 1
      %p52 = por %p50, %p51
      %p53 = scmp.ne.s32.totalorder %s42, %s43
      %p54 = scmp.eq.s32.totalorder %s20, 0
      %p55 = por %p53, %p54
      %p56 = scmp.ne.s32.totalorder %s42, %s43
      %p57 = scmp.eq.s32.totalorder %s21, 1
      %p58 = por %p56, %p57
      %p60 = scmp.ne.s32.totalorder %s43, %s59
      %p61 = scmp.eq.s32.totalorder %s21, 0
      %p62 = por %p60, %p61
      %s64 = sadd.s32 %s63, 1
      %p67 = scmp.eq.s32.totalorder %s15, 1
      %p68 = scmp.ne.s32.totalorder %s63, %s65
      %p69 = scmp.eq.s32.totalorder %s15, 0
      %p70 = por %p68, %p69
      %p71 = scmp.ne.s32.totalorder %s63, %s65
      %p72 = scmp.eq.s32.totalorder %s20, 1
      %p73 = por %p71, %p72
      %p74 = scmp.ne.s32.totalorder %s65, %s66
      %p75 = scmp.eq.s32.totalorder %s20, 0
      %p76 = por %p74, %p75
      %p77 = scmp.ne.s32.totalorder %s65, %s66
      %p78 = scmp.eq.s32.totalorder %s21, 1
      %p79 = por %p77, %p78
      %p81 = scmp.ne.s32.totalorder %s66, %s80
      %p82 = scmp.eq.s32.totalorder %s21, 0
      %p83 = por %p81, %p82
      %s84 = ssub.s32 %s22, %s34
      %s85 = ssub.s32 %s23, %s30
      %s86 = sor.u32 %s84, %s85
      %p87 = scmp.eq.s32.totalorder %s86, 0
      %s89 = sadd.s32 %s88, 1
      %s90 = scalar_select %p87, %s88, %s89
      %p93 = pneg %p87
      %p94 = scmp.eq.s32.totalorder %s15, 1
      %p95 = por %p93, %p94
      %p96 = scmp.ne.s32.totalorder %s88, %s91
      %p97 = scmp.eq.s32.totalorder %s15, 0
      %p98 = por %p96, %p97
      %p99 = scmp.ne.s32.totalorder %s88, %s91
      %p100 = scmp.eq.s32.totalorder %s20, 1
      %p101 = por %p99, %p100
      %p102 = scmp.ne.s32.totalorder %s91, %s92
      %p103 = scmp.eq.s32.totalorder %s20, 0
      %p104 = por %p102, %p103
      %p105 = scmp.ne.s32.totalorder %s91, %s92
      %p106 = scmp.eq.s32.totalorder %s21, 1
      %p107 = por %p105, %p106
      %p109 = scmp.ne.s32.totalorder %s92, %s108
      %p110 = scmp.eq.s32.totalorder %s21, 0
      %p111 = por %p109, %p110
      %p112 = scmp.le.s32.totalorder 1, %s15
      %p113 = scmp.lt.s32.totalorder %s15, 3
      %p114 = pnand %p112, %p113
      %p115 = pneg %p114
      // Predicated region
      $region9: #{tpu_custom_call.1} parent=5 // pred_check
        _
      $region10: #{tpu_custom_call.1} parent=5 // pred_check_branch
        %117 = sbr.rel (%p114) target = $region12
      $region11: #{tpu_custom_call.1} parent=5 // pred_region
        %s118 = ssub.s32 %s15, 1
        // Predicated region
        $region13: #{tpu_custom_call.1} parent=11 // pred_check
          %p119 = pneg %p76
        $region14: #{tpu_custom_call.1} parent=11 // pred_check_branch
          %121 = sbr.rel (%p119) target = $region16
        $region15: #{tpu_custom_call.1} parent=11 // pred_region
          %123 = vsyncadd [#allocation6], 0
          %s125 = sshll.u32 %s1, 4
          %s126 = int_to_ptr.hbm [resolvable:$true] %s125
          %s127 = sshll.u32 [#allocation5], 4
          %s128 = int_to_ptr.vmem [resolvable:$true] %s127
          %130 = dma.hbm_to_vmem [thread:$0]  %s126, 64, %s128, [#allocation6]
        $region16: #{tpu_custom_call.1} parent=11 // pred_fallthru
          _
      $region12: #{tpu_custom_call.1} parent=5 // pred_fallthru
        _
      %p131 = scmp.lt.s32.totalorder %s15, 2
      // Predicated region
      $region17: #{tpu_custom_call.1} parent=5 // pred_check
        %p132 = pneg %p131
      $region18: #{tpu_custom_call.1} parent=5 // pred_check_branch
        %134 = sbr.rel (%p132) target = $region20
      $region19: #{tpu_custom_call.1} parent=5 // pred_region
        // Predicated region
        $region21: #{tpu_custom_call.1} parent=19 // pred_check
          %p135 = pneg %p49
        $region22: #{tpu_custom_call.1} parent=19 // pred_check_branch
          %137 = sbr.rel (%p135) target = $region24
        $region23: #{tpu_custom_call.1} parent=19 // pred_region
          %s138 = sand.u32 %s39, 1
          %s139 = scalar_lea.sflag [#allocation3], %s138
          %s140 = sand.u32 %s39, 1
          %s141 = smul.addr %s140, 48
          %s142 = scalar_lea.vmem [#allocation2], %s141
          %s143 = smul.u32 2, %s23
          %145 = vsyncadd %s139, 0
          %s146 = smul.addr %s22, 12
          %s147 = sadd.s32 %s143, %s146
          %s148 = smul.addr %s147, 4
          %s149 = scalar_lea.hbm %s0, %s148
          %s150 = sshll.u32 %s149, 4
          %s151 = int_to_ptr.hbm [resolvable:$true] %s150
          %s152 = sshll.u32 %s142, 4
          %s153 = int_to_ptr.vmem [resolvable:$true] %s152
          %158 = dma.hbm_to_vmem [thread:$0]  %s151, 768, %s153, %s139, 128, 128, 8
        $region24: #{tpu_custom_call.1} parent=19 // pred_fallthru
          _
      $region20: #{tpu_custom_call.1} parent=5 // pred_fallthru
        _
      %p159 = scmp.le.s32.totalorder 1, %s15
      %p160 = scmp.lt.s32.totalorder %s15, 3
      %p161 = pnand %p159, %p160
      %p162 = pneg %p161
      // Predicated region
      $region25: #{tpu_custom_call.1} parent=5 // pred_check
        _
      $region26: #{tpu_custom_call.1} parent=5 // pred_check_branch
        %164 = sbr.rel (%p161) target = $region28
      $region27: #{tpu_custom_call.1} parent=5 // pred_region
        %s165 = ssub.s32 %s15, 1
        %s166 = sand.u32 %s42, 1
        %s167 = scalar_lea.sflag [#allocation3], %s166
        %s168 = sand.u32 %s42, 1
        %s169 = smul.addr %s168, 48
        %s170 = scalar_lea.vmem [#allocation2], %s169
        // Predicated region
        $region29: #{tpu_custom_call.1} parent=27 // pred_check
          %p171 = pneg %p55
        $region30: #{tpu_custom_call.1} parent=27 // pred_check_branch
          %173 = sbr.rel (%p171) target = $region32
        $region31: #{tpu_custom_call.1} parent=27 // pred_region
          %175 = dma.done %s167, 768
        $region32: #{tpu_custom_call.1} parent=27 // pred_fallthru
          _
        // Predicated region
        $region33: #{tpu_custom_call.1} parent=27 // pred_check
          %p176 = pneg %p76
        $region34: #{tpu_custom_call.1} parent=27 // pred_check_branch
          %178 = sbr.rel (%p176) target = $region36
        $region35: #{tpu_custom_call.1} parent=27 // pred_region
          %180 = dma.done [#allocation6], 64
        $region36: #{tpu_custom_call.1} parent=27 // pred_fallthru
          _
        %s181 = sand.u32 %s42, 1
        %s182 = scalar_lea.sflag [#allocation3], %s181
        %s183 = sand.u32 %s42, 1
        %s184 = smul.addr %s183, 48
        %s185 = scalar_lea.vmem [#allocation2], %s184
        %p186 = pneg %p55
        %p187 = pneg %p52
        %p188 = pneg %p76
        %p189 = pneg %p73
        %p190 = pneg %p104
        %p191 = pneg %p101
        %s192 = sand.u32 %s91, 1
        %s193 = scalar_lea.sflag [#allocation4], %s192
        %s194 = sand.u32 %s91, 1
        %s195 = smul.addr %s194, 16
        %s196 = scalar_lea.vmem [#allocation7], %s195
        %s197 = smul.u32 2, %s25
        %s198 = smul.u32 2, %s25
        %v200 = vld [vmem:[#allocation5] sm:$0xf]
        %v201 = vld [vmem:[%s170] sm:$0xff]
        %v202 = vld [vmem:[%s170 + $0x8] sm:$0xff]
        %v203 = vld [vmem:[%s170 + $0x10] sm:$0xff]
        %v204 = vld [vmem:[%s170 + $0x18] sm:$0xff]
        %v205 = vld [vmem:[%s170 + $0x20] sm:$0xff]
        %v206 = vld [vmem:[%s170 + $0x28] sm:$0xff]
        %v213 = vunpack.c.l.b16 %v201
        %v214 = vunpack.c.h.b16 %v201
        %v215 = vunpack.c.l.b16 %v202
        %v216 = vunpack.c.h.b16 %v202
        %v217 = vunpack.c.l.b16 %v203
        %v218 = vunpack.c.h.b16 %v203
        %v219 = vunpack.c.l.b16 %v204
        %v220 = vunpack.c.h.b16 %v204
        %v221 = vunpack.c.l.b16 %v205
        %v222 = vunpack.c.h.b16 %v205
        %v223 = vunpack.c.l.b16 %v206
        %v224 = vunpack.c.h.b16 %v206
        %v225 = vpack.c.b16 %v215, %v213
        %v226 = vpack.c.b16 %v216, %v214
        %v227 = vpack.c.b16 %v219, %v217
        %v228 = vpack.c.b16 %v220, %v218
        %v229 = vpack.c.b16 %v223, %v221
        %v230 = vpack.c.b16 %v224, %v222
        %vm237 = vcmask 392192
        %v239 = vsel %vm237, %v200, 0
        %241 = vmatpush.bf16.msra.mxu0 0
        %242 = vmatpush.bf16.msra.mxu0 0
        %243 = vmatpush.bf16.msra.mxu0 0
        %244 = vmatpush.bf16.msra.mxu0 0
        %245 = vmatpush.bf16.msra.mxu0 0
        %246 = vmatpush.bf16.msra.mxu0 %v229
        %247 = vmatpush.bf16.msra.mxu0 %v227
        %248 = vmatpush.bf16.msra.mxu0 %v225
        %249 = vmatmul.bf16.gmra.mxu0 %v239
        %v250 = vpop.f32.mrf.mxu0
        %v251 = vadd.f32 0.0, %v250
        %v252 = vpop.f32.mrf.mxu0
        %253 = vdwg.mxu0
        %254 = vmatpush.bf16.msra.mxu0 0
        %255 = vmatpush.bf16.msra.mxu0 0
        %256 = vmatpush.bf16.msra.mxu0 0
        %257 = vmatpush.bf16.msra.mxu0 0
        %258 = vmatpush.bf16.msra.mxu0 0
        %259 = vmatpush.bf16.msra.mxu0 %v230
        %260 = vmatpush.bf16.msra.mxu0 %v228
        %261 = vmatpush.bf16.msra.mxu0 %v226
        %262 = vmatmul.bf16.gmra.mxu0 %v239
        %v263 = vpop.f32.mrf.mxu0
        %v264 = vadd.f32 0.0, %v263
        %v265 = vpop.f32.mrf.mxu0
        %266 = vdwg.mxu0
        %v267 = vmax.f32 %v251, 0.0
        %v268 = vmax.f32 %v264, 0.0
        %269 = vst [vmem:[%s196] sm:$0xff] %v267
        %270 = vst [vmem:[%s196 + $0x8] sm:$0xff] %v268
        %s271 = sand.u32 %s91, 1
        %s272 = scalar_lea.sflag [#allocation4], %s271
        %s273 = sand.u32 %s91, 1
        %s274 = smul.addr %s273, 16
        %s275 = scalar_lea.vmem [#allocation7], %s274
        // Predicated region
        $region37: #{tpu_custom_call.1} parent=27 // pred_check
          %p276 = pneg %p101
        $region38: #{tpu_custom_call.1} parent=27 // pred_check_branch
          %278 = sbr.rel (%p276) target = $region40
        $region39: #{tpu_custom_call.1} parent=27 // pred_region
          %s279 = smul.u32 2, %s25
          %281 = vsyncadd %s272, 0
          %s282 = smul.addr %s24, 2
          %s283 = sadd.s32 %s279, %s282
          %s284 = smul.addr %s283, 8
          %s285 = scalar_lea.hbm %s2, %s284
          %s287 = sshll.u32 %s275, 4
          %s288 = int_to_ptr.vmem [resolvable:$true] %s287
          %s289 = sshll.u32 %s285, 4
          %s290 = int_to_ptr.hbm [resolvable:$true] %s289
          %292 = dma.vmem_to_hbm [thread:$0]  %s288, 256, %s290, %s272
        $region40: #{tpu_custom_call.1} parent=27 // pred_fallthru
          _
      $region28: #{tpu_custom_call.1} parent=5 // pred_fallthru
        _
      %p293 = scmp.le.s32.totalorder 2, %s15
      // Predicated region
      $region41: #{tpu_custom_call.1} parent=5 // pred_check
        %p294 = pneg %p293
      $region42: #{tpu_custom_call.1} parent=5 // pred_check_branch
        %296 = sbr.rel (%p294) target = $region44
      $region43: #{tpu_custom_call.1} parent=5 // pred_region
        %s297 = ssub.s32 %s15, 2
        // Predicated region
        $region45: #{tpu_custom_call.1} parent=43 // pred_check
          %p298 = pneg %p107
        $region46: #{tpu_custom_call.1} parent=43 // pred_check_branch
          %300 = sbr.rel (%p298) target = $region48
        $region47: #{tpu_custom_call.1} parent=43 // pred_region
          %s301 = sand.u32 %s92, 1
          %s302 = scalar_lea.sflag [#allocation4], %s301
          %s303 = sand.u32 %s92, 1
          %s304 = smul.addr %s303, 16
          %s305 = scalar_lea.vmem [#allocation7], %s304
          %307 = dma.done %s302, 256
        $region48: #{tpu_custom_call.1} parent=43 // pred_fallthru
          _
      $region44: #{tpu_custom_call.1} parent=5 // pred_fallthru
        _
    $region6: #{tpu_custom_call.1} parent=1 // loop_footer
      %s19 = sadd.s32 1, %s15
    $region7: #{tpu_custom_call.1} parent=1 // loop_footer_branch
      %14 = sbr.rel target = $region3
    $region8: #{tpu_custom_call.1} parent=1 // loop_exit
      _
    %308 = vsyncpa [#allocation3], 1
    %s309 = scalar_lea.sflag [#allocation3], 1
    %310 = vsyncpa %s309, 1
    %311 = vsyncpa [#allocation6], 1
    %312 = vsyncpa [#allocation4], 1
    %s313 = scalar_lea.sflag [#allocation4], 1
    %314 = vsyncpa %s313, 1

// kernel: tpu_custom_call.1
$region0: #{tpu_custom_call.1}
  #allocation0 [shape = 'u32[]', space=smem, size = 0x4, offset = 0x4, fixed_abs, tag = 'smem constant byte address 0x4 - core index']
  #allocation1 [shape = 'u32[72,128]{1,0:T(1,128)}', space=vmem, size = 0x9000, scoped, tag = 'internal scratch']
  %s0 = inlined_call_operand.hbm [shape: bf16[2,48,256], index: 0, kind: input, shape index: {}]
  %s1 = inlined_call_operand.hbm [shape: bf16[8,48], index: 1, kind: input, shape index: {}]
  %s2 = inlined_call_operand.hbm [shape: f32[2,8,256], index: 2, kind: output, shape index: {}]
  %s3 = sld [smem:[#allocation0]]
  $region49: #{tpu_custom_call.1} parent=0
    _
  %s5 = ssub.s32 1, %s3
  %s6 = scalar_select 0, %s5, %s3
  $region1: #{tpu_custom_call.1} parent=0
    #allocation2 [shape = 'u8[49152]{0}', space=vmem, size = 0xc000, scoped, tag = 'input window, operand 0']
    #allocation3 [shape = 's32[2]{0}', space=sflag, size = 0x8, scoped, tag = 'scoped memory for tpu_custom_call.1']
    #allocation4 [shape = 's32[2]{0}', space=sflag, size = 0x8, scoped, tag = 'scoped memory for tpu_custom_call.1']
    #allocation5 [shape = 'u8[2048]{0}', space=vmem, size = 0x800, scoped, tag = 'input window, operand 1, single buffered']
    #allocation6 [shape = 's32[1]{0}', space=sflag, size = 0x4, scoped, tag = 'scoped memory for tpu_custom_call.1']
    #allocation7 [shape = 'u8[16384]{0}', space=vmem, size = 0x4000, scoped, tag = 'output window, operand 0']
    %7 = vsyncpa [#allocation3], 0
    %s8 = scalar_lea.sflag [#allocation3], 1
    %9 = vsyncpa %s8, 0
    %10 = vsyncpa [#allocation6], 0
    %11 = vsyncpa [#allocation4], 0
    %s12 = scalar_lea.sflag [#allocation4], 1
    %13 = vsyncpa %s12, 0
    loop: start=0, step=1, limit=4
    $region2: #{tpu_custom_call.1} parent=1 // loop_pre_header
      _
    $region3: #{tpu_custom_call.1} parent=1 // loop_header
      %s15 = sphi 0, %s19
      %p16 = scmp.ge.s32.totalorder %s15, 4
      %s22 = sphi 0, %s34
      %s23 = sphi 0, %s30
      %s24 = sphi 0, %s22
      %s25 = sphi 0, %s23
      %s26 = sphi 0, %s24
      %s27 = sphi 0, %s25
      %s39 = sphi 0, %s41
      %s42 = sphi 0, %s39
      %s43 = sphi 0, %s42
      %s59 = sphi 0, %s43
      %s63 = sphi 0, %s63
      %s65 = sphi 0, %s63
      %s66 = sphi 0, %s65
      %s80 = sphi 0, %s66
      %s88 = sphi 0, %s90
      %s91 = sphi 0, %s88
      %s92 = sphi 0, %s91
      %s108 = sphi 0, %s92
    $region4: #{tpu_custom_call.1} parent=1 // loop_header_branch
      %18 = sbr.rel (%p16) target = $region8
    $region5: #{tpu_custom_call.1} parent=1 // loop_body
      %s20 = ssub.s32 %s15, 1
      %s21 = ssub.s32 %s15, 2
      %s28 = sadd.s32 1, %s23
      %p29 = scmp.ge.s32.totalorder %s28, 1
      %s30 = scalar_select %p29, 0, %s28
      %s31 = sadd.s32 1, %s22
      %s32 = scalar_select %p29, %s31, %s22
      %p33 = scmp.ge.s32.totalorder %s32, 2
      %s34 = scalar_select %p33, 0, %s32
      %s35 = ssub.s32 %s22, %s34
      %s36 = ssub.s32 %s23, %s30
      %s37 = sor.u32 %s35, %s36
      %p38 = scmp.eq.s32.totalorder %s37, 0
      %s40 = sadd.s32 %s39, 1
      %s41 = scalar_select %p38, %s39, %s40
      %p44 = pneg %p38
      %p45 = scmp.eq.s32.totalorder %s15, 1
      %p46 = por %p44, %p45
      %p47 = scmp.ne.s32.totalorder %s39, %s42
      %p48 = scmp.eq.s32.totalorder %s15, 0
      %p49 = por %p47, %p48
      %p50 = scmp.ne.s32.totalorder %s39, %s42
      %p51 = scmp.eq.s32.totalorder %s20, 1
      %p52 = por %p50, %p51
      %p53 = scmp.ne.s32.totalorder %s42, %s43
      %p54 = scmp.eq.s32.totalorder %s20, 0
      %p55 = por %p53, %p54
      %p56 = scmp.ne.s32.totalorder %s42, %s43
      %p57 = scmp.eq.s32.totalorder %s21, 1
      %p58 = por %p56, %p57
      %p60 = scmp.ne.s32.totalorder %s43, %s59
      %p61 = scmp.eq.s32.totalorder %s21, 0
      %p62 = por %p60, %p61
      %s64 = sadd.s32 %s63, 1
      %p67 = scmp.eq.s32.totalorder %s15, 1
      %p68 = scmp.ne.s32.totalorder %s63, %s65
      %p69 = scmp.eq.s32.totalorder %s15, 0
      %p70 = por %p68, %p69
      %p71 = scmp.ne.s32.totalorder %s63, %s65
      %p72 = scmp.eq.s32.totalorder %s20, 1
      %p73 = por %p71, %p72
      %p74 = scmp.ne.s32.totalorder %s65, %s66
      %p75 = scmp.eq.s32.totalorder %s20, 0
      %p76 = por %p74, %p75
      %p77 = scmp.ne.s32.totalorder %s65, %s66
      %p78 = scmp.eq.s32.totalorder %s21, 1
      %p79 = por %p77, %p78
      %p81 = scmp.ne.s32.totalorder %s66, %s80
      %p82 = scmp.eq.s32.totalorder %s21, 0
      %p83 = por %p81, %p82
      %s84 = ssub.s32 %s22, %s34
      %s85 = ssub.s32 %s23, %s30
      %s86 = sor.u32 %s84, %s85
      %p87 = scmp.eq.s32.totalorder %s86, 0
      %s89 = sadd.s32 %s88, 1
      %s90 = scalar_select %p87, %s88, %s89
      %p93 = pneg %p87
      %p94 = scmp.eq.s32.totalorder %s15, 1
      %p95 = por %p93, %p94
      %p96 = scmp.ne.s32.totalorder %s88, %s91
      %p97 = scmp.eq.s32.totalorder %s15, 0
      %p98 = por %p96, %p97
      %p99 = scmp.ne.s32.totalorder %s88, %s91
      %p100 = scmp.eq.s32.totalorder %s20, 1
      %p101 = por %p99, %p100
      %p102 = scmp.ne.s32.totalorder %s91, %s92
      %p103 = scmp.eq.s32.totalorder %s20, 0
      %p104 = por %p102, %p103
      %p105 = scmp.ne.s32.totalorder %s91, %s92
      %p106 = scmp.eq.s32.totalorder %s21, 1
      %p107 = por %p105, %p106
      %p109 = scmp.ne.s32.totalorder %s92, %s108
      %p110 = scmp.eq.s32.totalorder %s21, 0
      %p111 = por %p109, %p110
      %p112 = scmp.le.s32.totalorder 1, %s15
      %p113 = scmp.lt.s32.totalorder %s15, 3
      %p114 = pnand %p112, %p113
      %p115 = pneg %p114
      // Predicated region
      $region9: #{tpu_custom_call.1} parent=5 // pred_check
        _
      $region10: #{tpu_custom_call.1} parent=5 // pred_check_branch
        %117 = sbr.rel (%p114) target = $region12
      $region11: #{tpu_custom_call.1} parent=5 // pred_region
        %s118 = ssub.s32 %s15, 1
        // Predicated region
        $region13: #{tpu_custom_call.1} parent=11 // pred_check
          %p119 = pneg %p76
        $region14: #{tpu_custom_call.1} parent=11 // pred_check_branch
          %121 = sbr.rel (%p119) target = $region16
        $region15: #{tpu_custom_call.1} parent=11 // pred_region
          %123 = vsyncadd [#allocation6], 0
          %s125 = sshll.u32 %s1, 4
          %s126 = int_to_ptr.hbm [resolvable:$true] %s125
          %s127 = sshll.u32 [#allocation5], 4
          %s128 = int_to_ptr.vmem [resolvable:$true] %s127
          %130 = dma.hbm_to_vmem [thread:$0]  %s126, 64, %s128, [#allocation6]
        $region16: #{tpu_custom_call.1} parent=11 // pred_fallthru
          _
      $region12: #{tpu_custom_call.1} parent=5 // pred_fallthru
        _
      %p131 = scmp.lt.s32.totalorder %s15, 2
      // Predicated region
      $region17: #{tpu_custom_call.1} parent=5 // pred_check
        %p132 = pneg %p131
      $region18: #{tpu_custom_call.1} parent=5 // pred_check_branch
        %134 = sbr.rel (%p132) target = $region20
      $region19: #{tpu_custom_call.1} parent=5 // pred_region
        // Predicated region
        $region21: #{tpu_custom_call.1} parent=19 // pred_check
          %p135 = pneg %p49
        $region22: #{tpu_custom_call.1} parent=19 // pred_check_branch
          %137 = sbr.rel (%p135) target = $region24
        $region23: #{tpu_custom_call.1} parent=19 // pred_region
          %s138 = sand.u32 %s39, 1
          %s139 = scalar_lea.sflag [#allocation3], %s138
          %s140 = sand.u32 %s39, 1
          %s141 = smul.addr %s140, 48
          %s142 = scalar_lea.vmem [#allocation2], %s141
          %s143 = smul.u32 2, %s23
          %145 = vsyncadd %s139, 0
          %s146 = smul.addr %s22, 12
          %s147 = sadd.s32 %s143, %s146
          %s148 = smul.addr %s147, 4
          %s149 = scalar_lea.hbm %s0, %s148
          %s150 = sshll.u32 %s149, 4
          %s151 = int_to_ptr.hbm [resolvable:$true] %s150
          %s152 = sshll.u32 %s142, 4
          %s153 = int_to_ptr.vmem [resolvable:$true] %s152
          %158 = dma.hbm_to_vmem [thread:$0]  %s151, 768, %s153, %s139, 128, 128, 8
        $region24: #{tpu_custom_call.1} parent=19 // pred_fallthru
          _
      $region20: #{tpu_custom_call.1} parent=5 // pred_fallthru
        _
      %p159 = scmp.le.s32.totalorder 1, %s15
      %p160 = scmp.lt.s32.totalorder %s15, 3
      %p161 = pnand %p159, %p160
      %p162 = pneg %p161
      // Predicated region
      $region25: #{tpu_custom_call.1} parent=5 // pred_check
        _
      $region26: #{tpu_custom_call.1} parent=5 // pred_check_branch
        %164 = sbr.rel (%p161) target = $region28
      $region27: #{tpu_custom_call.1} parent=5 // pred_region
        %s165 = ssub.s32 %s15, 1
        %s166 = sand.u32 %s42, 1
        %s167 = scalar_lea.sflag [#allocation3], %s166
        %s168 = sand.u32 %s42, 1
        %s169 = smul.addr %s168, 48
        %s170 = scalar_lea.vmem [#allocation2], %s169
        // Predicated region
        $region29: #{tpu_custom_call.1} parent=27 // pred_check
          %p171 = pneg %p55
        $region30: #{tpu_custom_call.1} parent=27 // pred_check_branch
          %173 = sbr.rel (%p171) target = $region32
        $region31: #{tpu_custom_call.1} parent=27 // pred_region
          %175 = dma.done %s167, 768
        $region32: #{tpu_custom_call.1} parent=27 // pred_fallthru
          _
        // Predicated region
        $region33: #{tpu_custom_call.1} parent=27 // pred_check
          %p176 = pneg %p76
        $region34: #{tpu_custom_call.1} parent=27 // pred_check_branch
          %178 = sbr.rel (%p176) target = $region36
        $region35: #{tpu_custom_call.1} parent=27 // pred_region
          %180 = dma.done [#allocation6], 64
        $region36: #{tpu_custom_call.1} parent=27 // pred_fallthru
          _
        %s181 = sand.u32 %s42, 1
        %s182 = scalar_lea.sflag [#allocation3], %s181
        %s183 = sand.u32 %s42, 1
        %s184 = smul.addr %s183, 48
        %s185 = scalar_lea.vmem [#allocation2], %s184
        %p186 = pneg %p55
        %p187 = pneg %p52
        %p188 = pneg %p76
        %p189 = pneg %p73
        %p190 = pneg %p104
        %p191 = pneg %p101
        %s192 = sand.u32 %s91, 1
        %s193 = scalar_lea.sflag [#allocation4], %s192
        %s194 = sand.u32 %s91, 1
        %s195 = smul.addr %s194, 16
        %s196 = scalar_lea.vmem [#allocation7], %s195
        %s197 = smul.u32 2, %s25
        %s198 = smul.u32 2, %s25
        %v200 = vld [vmem:[#allocation5] sm:$0xf]
        %v201 = vld [vmem:[%s170] sm:$0xff]
        %v202 = vld [vmem:[%s170 + $0x8] sm:$0xff]
        %v203 = vld [vmem:[%s170 + $0x10] sm:$0xff]
        %v204 = vld [vmem:[%s170 + $0x18] sm:$0xff]
        %v205 = vld [vmem:[%s170 + $0x20] sm:$0xff]
        %v206 = vld [vmem:[%s170 + $0x28] sm:$0xff]
        %v213 = vunpack.c.l.b16 %v201
        %v214 = vunpack.c.h.b16 %v201
        %v215 = vunpack.c.l.b16 %v202
        %v216 = vunpack.c.h.b16 %v202
        %v217 = vunpack.c.l.b16 %v203
        %v218 = vunpack.c.h.b16 %v203
        %v219 = vunpack.c.l.b16 %v204
        %v220 = vunpack.c.h.b16 %v204
        %v221 = vunpack.c.l.b16 %v205
        %v222 = vunpack.c.h.b16 %v205
        %v223 = vunpack.c.l.b16 %v206
        %v224 = vunpack.c.h.b16 %v206
        %v225 = vpack.c.b16 %v215, %v213
        %v226 = vpack.c.b16 %v216, %v214
        %v227 = vpack.c.b16 %v219, %v217
        %v228 = vpack.c.b16 %v220, %v218
        %v229 = vpack.c.b16 %v223, %v221
        %v230 = vpack.c.b16 %v224, %v222
        %vm237 = vcmask 392192
        %v239 = vsel %vm237, %v200, 0
        %241 = vmatpush.bf16.msra.mxu0 0
        %242 = vmatpush.bf16.msra.mxu0 0
        %243 = vmatpush.bf16.msra.mxu0 0
        %244 = vmatpush.bf16.msra.mxu0 0
        %245 = vmatpush.bf16.msra.mxu0 0
        %246 = vmatpush.bf16.msra.mxu0 %v229
        %247 = vmatpush.bf16.msra.mxu0 %v227
        %248 = vmatpush.bf16.msra.mxu0 %v225
        %249 = vmatmul.bf16.gmra.mxu0 %v239
        %v250 = vpop.f32.mrf.mxu0
        %v251 = vadd.f32 0.0, %v250
        %v252 = vpop.f32.mrf.mxu0
        %253 = vdwg.mxu0
        %254 = vmatpush.bf16.msra.mxu0 0
        %255 = vmatpush.bf16.msra.mxu0 0
        %256 = vmatpush.bf16.msra.mxu0 0
        %257 = vmatpush.bf16.msra.mxu0 0
        %258 = vmatpush.bf16.msra.mxu0 0
        %259 = vmatpush.bf16.msra.mxu0 %v230
        %260 = vmatpush.bf16.msra.mxu0 %v228
        %261 = vmatpush.bf16.msra.mxu0 %v226
        %262 = vmatmul.bf16.gmra.mxu0 %v239
        %v263 = vpop.f32.mrf.mxu0
        %v264 = vadd.f32 0.0, %v263
        %v265 = vpop.f32.mrf.mxu0
        %266 = vdwg.mxu0
        %v267 = vmax.f32 %v251, 0.0
        %v268 = vmax.f32 %v264, 0.0
        %269 = vst [vmem:[%s196] sm:$0xff] %v267
        %270 = vst [vmem:[%s196 + $0x8] sm:$0xff] %v268
        %s271 = sand.u32 %s91, 1
        %s272 = scalar_lea.sflag [#allocation4], %s271
        %s273 = sand.u32 %s91, 1
        %s274 = smul.addr %s273, 16
        %s275 = scalar_lea.vmem [#allocation7], %s274
        // Predicated region
        $region37: #{tpu_custom_call.1} parent=27 // pred_check
          %p276 = pneg %p101
        $region38: #{tpu_custom_call.1} parent=27 // pred_check_branch
          %278 = sbr.rel (%p276) target = $region40
        $region39: #{tpu_custom_call.1} parent=27 // pred_region
          %s279 = smul.u32 2, %s25
          %281 = vsyncadd %s272, 0
          %s282 = smul.addr %s24, 2
          %s283 = sadd.s32 %s279, %s282
          %s284 = smul.addr %s283, 8
          %s285 = scalar_lea.hbm %s2, %s284
          %s287 = sshll.u32 %s275, 4
          %s288 = int_to_ptr.vmem [resolvable:$true] %s287
          %s289 = sshll.u32 %s285, 4
          %s290 = int_to_ptr.hbm [resolvable:$true] %s289
          %292 = dma.vmem_to_hbm [thread:$0]  %s288, 256, %s290, %s272
        $region40: #{tpu_custom_call.1} parent=27 // pred_fallthru
          _
      $region28: #{tpu_custom_call.1} parent=5 // pred_fallthru
        _
      %p293 = scmp.le.s32.totalorder 2, %s15
      // Predicated region
      $region41: #{tpu_custom_call.1} parent=5 // pred_check
        %p294 = pneg %p293
      $region42: #{tpu_custom_call.1} parent=5 // pred_check_branch
        %296 = sbr.rel (%p294) target = $region44
      $region43: #{tpu_custom_call.1} parent=5 // pred_region
        %s297 = ssub.s32 %s15, 2
        // Predicated region
        $region45: #{tpu_custom_call.1} parent=43 // pred_check
          %p298 = pneg %p107
        $region46: #{tpu_custom_call.1} parent=43 // pred_check_branch
          %300 = sbr.rel (%p298) target = $region48
        $region47: #{tpu_custom_call.1} parent=43 // pred_region
          %s301 = sand.u32 %s92, 1
          %s302 = scalar_lea.sflag [#allocation4], %s301
          %s303 = sand.u32 %s92, 1
          %s304 = smul.addr %s303, 16
          %s305 = scalar_lea.vmem [#allocation7], %s304
          %307 = dma.done %s302, 256
        $region48: #{tpu_custom_call.1} parent=43 // pred_fallthru
          _
      $region44: #{tpu_custom_call.1} parent=5 // pred_fallthru
        _
    $region6: #{tpu_custom_call.1} parent=1 // loop_footer
      %s19 = sadd.s32 1, %s15
    $region7: #{tpu_custom_call.1} parent=1 // loop_footer_branch
      %14 = sbr.rel target = $region3
    $region8: #{tpu_custom_call.1} parent=1 // loop_exit
      _
    %308 = vsyncpa [#allocation3], 1
    %s309 = scalar_lea.sflag [#allocation3], 1
    %310 = vsyncpa %s309, 1
    %311 = vsyncpa [#allocation6], 1
    %312 = vsyncpa [#allocation4], 1
    %s313 = scalar_lea.sflag [#allocation4], 1
    %314 = vsyncpa %s313, 1

</llo_original>
